<compile_context>
chip_gen: v6e
topology: v6e:2x2x1
jax: 0.10.0
libtpu: 0.0.40
codegen_flags: <defaults>
</compile_context>

<pallas_src>
import functools

import jax
import jax.numpy as jnp
from jax import lax
from jax.experimental import pallas as pl
from jax.experimental.pallas import tpu as pltpu


def _myloss_kernel(pred_ref, real_ref, out_ref, *, b_total):
    """One (TB, C) batch tile: accumulate sum(CE) and sum(SE) into out_ref[0, 0:2]."""
    t = pl.program_id(1)                    # reduction step within this core's tile range
    n_t = pl.num_programs(1)
    tile = pl.program_id(0) * n_t + t       # global batch-tile index

    # Init the resident accumulator block once per core (output block index does not
    # change along the "arbitrary" axis, so it stays in VMEM until the last step).
    @pl.when(t == 0)
    def _init():
        out_ref[...] = jnp.zeros_like(out_ref)

    pred = pred_ref[...].astype(jnp.float32)    # (TB, C) — accepts bf16 inputs
    real = real_ref[...].astype(jnp.float32)    # (TB, C)
    TB, C = pred.shape
    K = C - 1                                   # number of policy classes
    neg_inf = jnp.float32(-jnp.inf)

    col = lax.broadcasted_iota(jnp.int32, (TB, C), 1)   # lane (channel) index
    row = lax.broadcasted_iota(jnp.int32, (TB, 1), 0)   # sublane (row-in-tile) index

    # Row mask for a ragged last tile: global row must be < B.
    g_row = tile * TB + row
    valid = g_row < b_total                              # (TB, 1) bool

    # ---- Cross-entropy over columns [0, K) -------------------------------------------
    # target = argmax(real[:, :K]) with torch tie-breaking (first maximal index).
    r_pol = jnp.where(col < K, real, neg_inf)
    rmax = jnp.max(r_pol, axis=1, keepdims=True)
    tgt_idx = jnp.min(jnp.where(r_pol == rmax, col, K), axis=1, keepdims=True)   # (TB, 1)

    # gather logit at target index via one-hot select (tgt_idx < K, so col K excluded).
    target_logit = jnp.sum(jnp.where(col == tgt_idx, pred, 0.0),
                           axis=1, keepdims=True)                                 # (TB, 1)

    # stable logsumexp over the K policy logits (col K masked to -inf -> exp == 0).
    p_pol = jnp.where(col < K, pred, neg_inf)
    m = jnp.max(p_pol, axis=1, keepdims=True)
    lse = jnp.log(jnp.sum(jnp.exp(p_pol - m), axis=1, keepdims=True)) + m          # (TB, 1)

    ce_sum = jnp.sum(jnp.where(valid, lse - target_logit, 0.0))                    # scalar

    # ---- Squared error on the value column (col == K), no 1-lane slice ---------------
    diff = pred - real
    se_mask = jnp.logical_and(valid, col == K)
    se_sum = jnp.sum(jnp.where(se_mask, diff * diff, 0.0))                         # scalar

    # ---- Accumulate partial sums into out_ref[0, 0] (CE) and out_ref[0, 1] (SE) ------
    r8 = lax.broadcasted_iota(jnp.int32, (8, 128), 0)
    c128 = lax.broadcasted_iota(jnp.int32, (8, 128), 1)
    contrib = (jnp.where((r8 == 0) & (c128 == 0), ce_sum, 0.0)
               + jnp.where((r8 == 0) & (c128 == 1), se_sum, 0.0))
    out_ref[...] += contrib


def my_loss(predict, real, *, tb=2048):
    """loss = CrossEntropy(predict[:, :-1], argmax(real[:, :-1])) + MSE(predict[:, -1:], real[:, -1:])."""
    B, C = predict.shape
    assert real.shape == (B, C)
    assert tb % 8 == 0, "batch tile must be a sublane multiple"

    TB = B if B <= tb else tb                 # full-array block is allowed for small B
    n_tiles = pl.cdiv(B, TB)

    # v7x megacore: split the batch tiles across 2 TensorCores when they split evenly;
    # on v5e/v6e (single TC) the extra parallel axis just runs serially (no cost).
    NC = 2 if (n_tiles >= 2 and n_tiles % 2 == 0) else 1
    tpc = n_tiles // NC

    kernel = functools.partial(_myloss_kernel, b_total=B)
    in_idx = lambda c, t: (c * tpc + t, 0)

    partials = pl.pallas_call(
        kernel,
        out_shape=jax.ShapeDtypeStruct((NC * 8, 128), jnp.float32),
        grid_spec=pltpu.PrefetchScalarGridSpec(
            num_scalar_prefetch=0,
            grid=(NC, tpc),
            in_specs=[
                pl.BlockSpec((TB, C), in_idx),
                pl.BlockSpec((TB, C), in_idx),
            ],
            # One lane-dense (8,128) partial-sum block per core; resident across the
            # reduction axis (index depends only on the parallel axis).
            out_specs=pl.BlockSpec((8, 128), lambda c, t: (c, 0)),
        ),
        compiler_params=pltpu.CompilerParams(
            dimension_semantics=("parallel", "arbitrary"),
        ),
    )(predict, real)

    # Combine per-core partial sums and divide by B exactly once.
    ce_sum = jnp.sum(partials[0::8, 0])
    se_sum = jnp.sum(partials[0::8, 1])
    return (ce_sum + se_sum) / B


def _reference(predict, real):
    # pure-JAX reference replicating the PyTorch module
    logits = predict[:, :-1]
    target = jnp.argmax(real[:, :-1], axis=1)
    lse = jax.scipy.special.logsumexp(logits, axis=1)
    tgt_logit = jnp.take_along_axis(logits, target[:, None], axis=1)[:, 0]
    loss_1 = jnp.mean(lse - tgt_logit)
    loss_2 = jnp.mean((predict[:, -1:] - real[:, -1:]) ** 2)
    return loss_1 + loss_2


if __name__ == "__main__":
    key = jax.random.PRNGKey(0)
    k1, k2 = jax.random.split(key)
    C = 17  # 16 policy classes + 1 value column

    # Case 1: single-tile path (TB == B).
    B = 8
    predict = jax.random.normal(k1, (B, C), dtype=jnp.float32)
    real = jax.random.uniform(k2, (B, C), dtype=jnp.float32)
    out = jax.block_until_ready(my_loss(predict, real))
    ref = _reference(predict, real)
    assert jnp.allclose(out, ref, rtol=1e-5, atol=1e-5), (out, ref)

    # Case 2: multi-tile reduction path with the 2-way parallel (megacore) grid axis.
    B2 = 64
    k3, k4 = jax.random.split(k2)
    predict2 = jax.random.normal(k3, (B2, C), dtype=jnp.float32)
    real2 = jax.random.uniform(k4, (B2, C), dtype=jnp.float32)
    out2 = jax.block_until_ready(my_loss(predict2, real2, tb=16))
    ref2 = _reference(predict2, real2)
    assert jnp.allclose(out2, ref2, rtol=1e-5, atol=1e-5), (out2, ref2)

    print("KERNEL_OK")
</pallas_src>

<mosaic_0001>
module attributes {stable_mosaic.version = 11 : i64} {
  func.func @_myloss_kernel(%arg0: i32, %arg1: i32, %arg2: memref<8x17xf32, #tpu.memory_space<vmem>>, %arg3: memref<8x17xf32, #tpu.memory_space<vmem>>, %arg4: memref<8x128xf32, #tpu.memory_space<vmem>>) attributes {dimension_semantics = [#tpu.dimension_semantics<parallel>, #tpu.dimension_semantics<arbitrary>], iteration_bounds = array<i64: 1, 1>, scalar_prefetch = 0 : i64, scratch_operands = 0 : i64, tpu.core_type = #tpu.core_type<tc>, window_params = [{transform_indices = @transform_0, window_bounds = array<i64: 8, 17>}, {transform_indices = @transform_1, window_bounds = array<i64: 8, 17>}, {transform_indices = @transform_2, window_bounds = array<i64: 8, 128>}]} {
    %c1_i32 = arith.constant 1 : i32
    %0 = arith.muli %arg0, %c1_i32 : i32
    %1 = arith.addi %0, %arg1 : i32
    %c0_i32 = arith.constant 0 : i32
    %2 = arith.cmpi eq, %arg1, %c0_i32 : i32
    %3 = arith.extui %2 : i1 to i32
    %c0_i32_0 = arith.constant 0 : i32
    %4 = arith.cmpi ne, %3, %c0_i32_0 : i32
    scf.if %4 {
      %cst_29 = arith.constant 0.000000e+00 : f32
      %86 = vector.broadcast %cst_29 : f32 to vector<8x128xf32>
      %c0_30 = arith.constant 0 : index
      %c0_31 = arith.constant 0 : index
      %87 = vector.load %arg4[%c0_30, %c0_31] : memref<8x128xf32, #tpu.memory_space<vmem>>, vector<8x128xf32>
      tpu.vector_store %arg4[%c0_30, %c0_31], %86 {strides = array<i32>} : memref<8x128xf32, #tpu.memory_space<vmem>>, vector<8x128xf32>,
    } else {
    }
    %c0 = arith.constant 0 : index
    %c0_1 = arith.constant 0 : index
    %5 = vector.load %arg2[%c0, %c0_1] : memref<8x17xf32, #tpu.memory_space<vmem>>, vector<8x17xf32>
    %c0_2 = arith.constant 0 : index
    %c0_3 = arith.constant 0 : index
    %6 = vector.load %arg3[%c0_2, %c0_3] : memref<8x17xf32, #tpu.memory_space<vmem>>, vector<8x17xf32>
    %7 = tpu.iota {dimensions = array<i32: 1>} : vector<8x17xi32>
    %8 = tpu.iota {dimensions = array<i32: 0>} : vector<8x1xi32>
    %c8_i32 = arith.constant 8 : i32
    %9 = arith.muli %1, %c8_i32 : i32
    %10 = vector.broadcast %9 : i32 to vector<8x1xi32>
    %11 = arith.addi %10, %8 : vector<8x1xi32>
    %c8_i32_4 = arith.constant 8 : i32
    %12 = vector.broadcast %c8_i32_4 : i32 to vector<8x1xi32>
    %13 = arith.cmpi slt, %11, %12 : vector<8x1xi32>
    %c16_i32 = arith.constant 16 : i32
    %14 = vector.broadcast %c16_i32 : i32 to vector<8x17xi32>
    %15 = arith.cmpi slt, %7, %14 : vector<8x17xi32>
    %cst = arith.constant 0xFF800000 : f32
    %16 = vector.broadcast %cst : f32 to vector<8x17xf32>
    %17 = arith.select %15, %6, %16 : vector<8x17xi1>, vector<8x17xf32>
    %cst_5 = arith.constant dense<0xFF800000> : vector<8xf32>
    %18 = vector.multi_reduction <maximumf>, %17, %cst_5 [1] : vector<8x17xf32> to vector<8xf32>
    %19 = vector.shape_cast %18 : vector<8xf32> to vector<8x1xf32>
    %20 = vector.broadcast %19 : vector<8x1xf32> to vector<8x17xf32>
    %21 = arith.cmpf oeq, %17, %20 : vector<8x17xf32>
    %c16_i32_6 = arith.constant 16 : i32
    %22 = vector.broadcast %c16_i32_6 : i32 to vector<8x17xi32>
    %23 = arith.select %21, %7, %22 : vector<8x17xi1>, vector<8x17xi32>
    %cst_7 = arith.constant dense<2147483647> : vector<8xi32>
    %24 = vector.multi_reduction <minsi>, %23, %cst_7 [1] : vector<8x17xi32> to vector<8xi32>
    %25 = vector.shape_cast %24 : vector<8xi32> to vector<8x1xi32>
    %26 = vector.broadcast %25 : vector<8x1xi32> to vector<8x17xi32>
    %27 = arith.cmpi eq, %7, %26 : vector<8x17xi32>
    %cst_8 = arith.constant 0.000000e+00 : f32
    %28 = vector.broadcast %cst_8 : f32 to vector<8x17xf32>
    %29 = arith.select %27, %5, %28 : vector<8x17xi1>, vector<8x17xf32>
    %cst_9 = arith.constant dense<0.000000e+00> : vector<8xf32>
    %30 = vector.multi_reduction <add>, %29, %cst_9 [1] : vector<8x17xf32> to vector<8xf32>
    %31 = vector.shape_cast %30 : vector<8xf32> to vector<8x1xf32>
    %c16_i32_10 = arith.constant 16 : i32
    %32 = vector.broadcast %c16_i32_10 : i32 to vector<8x17xi32>
    %33 = arith.cmpi slt, %7, %32 : vector<8x17xi32>
    %cst_11 = arith.constant 0xFF800000 : f32
    %34 = vector.broadcast %cst_11 : f32 to vector<8x17xf32>
    %35 = arith.select %33, %5, %34 : vector<8x17xi1>, vector<8x17xf32>
    %cst_12 = arith.constant dense<0xFF800000> : vector<8xf32>
    %36 = vector.multi_reduction <maximumf>, %35, %cst_12 [1] : vector<8x17xf32> to vector<8xf32>
    %37 = vector.shape_cast %36 : vector<8xf32> to vector<8x1xf32>
    %38 = vector.broadcast %37 : vector<8x1xf32> to vector<8x17xf32>
    %39 = arith.subf %35, %38 : vector<8x17xf32>
    %40 = math.exp %39 : vector<8x17xf32>
    %cst_13 = arith.constant dense<0.000000e+00> : vector<8xf32>
    %41 = vector.multi_reduction <add>, %40, %cst_13 [1] : vector<8x17xf32> to vector<8xf32>
    %42 = vector.shape_cast %41 : vector<8xf32> to vector<8x1xf32>
    %43 = math.log %42 : vector<8x1xf32>
    %44 = arith.addf %43, %37 : vector<8x1xf32>
    %45 = arith.subf %44, %31 : vector<8x1xf32>
    %cst_14 = arith.constant 0.000000e+00 : f32
    %46 = vector.broadcast %cst_14 : f32 to vector<8x1xf32>
    %47 = arith.select %13, %45, %46 : vector<8x1xi1>, vector<8x1xf32>
    %48 = vector.shape_cast %47 : vector<8x1xf32> to vector<1x8x1xf32>
    %cst_15 = arith.constant dense<0.000000e+00> : vector<1xf32>
    %49 = vector.multi_reduction <add>, %48, %cst_15 [1, 2] : vector<1x8x1xf32> to vector<1xf32>
    %50 = vector.shape_cast %49 : vector<1xf32> to vector<1x1x1xf32>
    %51 = vector.extract %50[0, 0, 0] : f32 from vector<1x1x1xf32>
    %52 = arith.subf %5, %6 : vector<8x17xf32>
    %c16_i32_16 = arith.constant 16 : i32
    %53 = vector.broadcast %c16_i32_16 : i32 to vector<8x17xi32>
    %54 = arith.cmpi eq, %7, %53 : vector<8x17xi32>
    %55 = vector.broadcast %13 : vector<8x1xi1> to vector<8x17xi1>
    %56 = arith.andi %55, %54 : vector<8x17xi1>
    %57 = arith.mulf %52, %52 : vector<8x17xf32>
    %cst_17 = arith.constant 0.000000e+00 : f32
    %58 = vector.broadcast %cst_17 : f32 to vector<8x17xf32>
    %59 = arith.select %56, %57, %58 : vector<8x17xi1>, vector<8x17xf32>
    %60 = vector.shape_cast %59 : vector<8x17xf32> to vector<1x8x17xf32>
    %cst_18 = arith.constant dense<0.000000e+00> : vector<1xf32>
    %61 = vector.multi_reduction <add>, %60, %cst_18 [1, 2] : vector<1x8x17xf32> to vector<1xf32>
    %62 = vector.shape_cast %61 : vector<1xf32> to vector<1x1x1xf32>
    %63 = vector.extract %62[0, 0, 0] : f32 from vector<1x1x1xf32>
    %64 = tpu.iota {dimensions = array<i32: 0>} : vector<8x128xi32>
    %65 = tpu.iota {dimensions = array<i32: 1>} : vector<8x128xi32>
    %c0_i32_19 = arith.constant 0 : i32
    %66 = vector.broadcast %c0_i32_19 : i32 to vector<8x128xi32>
    %67 = arith.cmpi eq, %64, %66 : vector<8x128xi32>
    %c0_i32_20 = arith.constant 0 : i32
    %68 = vector.broadcast %c0_i32_20 : i32 to vector<8x128xi32>
    %69 = arith.cmpi eq, %65, %68 : vector<8x128xi32>
    %70 = arith.andi %67, %69 : vector<8x128xi1>
    %cst_21 = arith.constant 0.000000e+00 : f32
    %71 = vector.broadcast %51 : f32 to vector<8x128xf32>
    %72 = vector.broadcast %cst_21 : f32 to vector<8x128xf32>
    %73 = arith.select %70, %71, %72 : vector<8x128xi1>, vector<8x128xf32>
    %c0_i32_22 = arith.constant 0 : i32
    %74 = vector.broadcast %c0_i32_22 : i32 to vector<8x128xi32>
    %75 = arith.cmpi eq, %64, %74 : vector<8x128xi32>
    %c1_i32_23 = arith.constant 1 : i32
    %76 = vector.broadcast %c1_i32_23 : i32 to vector<8x128xi32>
    %77 = arith.cmpi eq, %65, %76 : vector<8x128xi32>
    %78 = arith.andi %75, %77 : vector<8x128xi1>
    %cst_24 = arith.constant 0.000000e+00 : f32
    %79 = vector.broadcast %63 : f32 to vector<8x128xf32>
    %80 = vector.broadcast %cst_24 : f32 to vector<8x128xf32>
    %81 = arith.select %78, %79, %80 : vector<8x128xi1>, vector<8x128xf32>
    %82 = arith.addf %73, %81 : vector<8x128xf32>
    %c0_25 = arith.constant 0 : index
    %c0_26 = arith.constant 0 : index
    %83 = vector.load %arg4[%c0_25, %c0_26] : memref<8x128xf32, #tpu.memory_space<vmem>>, vector<8x128xf32>
    %84 = arith.addf %83, %82 : vector<8x128xf32>
    %c0_27 = arith.constant 0 : index
    %c0_28 = arith.constant 0 : index
    %85 = vector.load %arg4[%c0_27, %c0_28] : memref<8x128xf32, #tpu.memory_space<vmem>>, vector<8x128xf32>
    tpu.vector_store %arg4[%c0_27, %c0_28], %84 {strides = array<i32>} : memref<8x128xf32, #tpu.memory_space<vmem>>, vector<8x128xf32>,
    return
  }
  func.func @transform_0(%arg0: i32, %arg1: i32) -> (i32, i32) {
    %c1_i32 = arith.constant 1 : i32
    %0 = arith.muli %arg0, %c1_i32 : i32
    %1 = arith.addi %0, %arg1 : i32
    %c0_i32 = arith.constant 0 : i32
    %c0_i32_0 = arith.constant 0 : i32
    return %1, %c0_i32 : i32, i32
  }
  func.func @transform_1(%arg0: i32, %arg1: i32) -> (i32, i32) {
    %c1_i32 = arith.constant 1 : i32
    %0 = arith.muli %arg0, %c1_i32 : i32
    %1 = arith.addi %0, %arg1 : i32
    %c0_i32 = arith.constant 0 : i32
    %c0_i32_0 = arith.constant 0 : i32
    return %1, %c0_i32 : i32, i32
  }
  func.func @transform_2(%arg0: i32, %arg1: i32) -> (i32, i32) {
    %c0_i32 = arith.constant 0 : i32
    %c0_i32_0 = arith.constant 0 : i32
    return %arg0, %c0_i32 : i32, i32
  }
}

</mosaic_0001>

<llo_original>
// kernel: tpu_custom_call.1
$region0: #{tpu_custom_call.1}
  #allocation0 [shape = 'u32[]', space=smem, size = 0x4, offset = 0x4, fixed_abs, tag = 'smem constant byte address 0x4 - core index']
  #allocation1 [shape = 'u32[144,128]{1,0:T(1,128)}', space=vmem, size = 0x12000, scoped, tag = 'internal scratch']
  %s0 = inlined_call_operand.hbm [shape: f32[8,17], index: 0, kind: input, shape index: {}]
  %s1 = inlined_call_operand.hbm [shape: f32[8,17], index: 1, kind: input, shape index: {}]
  %s2 = inlined_call_operand.hbm [shape: f32[8,128], index: 2, kind: output, shape index: {}]
  %s3 = sld [smem:[#allocation0]]
  $region30: #{tpu_custom_call.1} parent=0
    _
  %s5 = ssub.s32 1, %s3
  %s6 = scalar_select 0, %s5, %s3
  $region1: #{tpu_custom_call.1} parent=0
    #allocation2 [shape = 'u8[4096]{0}', space=vmem, size = 0x1000, scoped, tag = 'input window, operand 0, single buffered']
    #allocation3 [shape = 's32[1]{0}', space=sflag, size = 0x4, scoped, tag = 'scoped memory for tpu_custom_call.1']
    #allocation4 [shape = 's32[1]{0}', space=sflag, size = 0x4, scoped, tag = 'scoped memory for tpu_custom_call.1']
    #allocation5 [shape = 'u8[4096]{0}', space=vmem, size = 0x1000, scoped, tag = 'input window, operand 1, single buffered']
    #allocation6 [shape = 's32[1]{0}', space=sflag, size = 0x4, scoped, tag = 'scoped memory for tpu_custom_call.1']
    #allocation7 [shape = 'u8[4096]{0}', space=vmem, size = 0x1000, scoped, tag = 'output window, operand 0, single buffered']
    %7 = vsyncpa [#allocation3], 0
    %8 = vsyncpa [#allocation6], 0
    %9 = vsyncpa [#allocation4], 0
    // Predicated region
    $region2: #{tpu_custom_call.1} parent=1 // pred_check
      _
    $region3: #{tpu_custom_call.1} parent=1 // pred_check_branch
      %11 = sbr.rel (0) target = $region5
    $region4: #{tpu_custom_call.1} parent=1 // pred_region
      %s12 = sadd.s32 0, 0
      %s14 = ssub.s32 128, 128
      %15 = vsyncadd [#allocation3], %s14
      %s16 = smul.addr %s12, 128
      %s17 = scalar_lea.hbm %s0, %s16
      %s19 = sshll.u32 [#allocation2], 4
      %s20 = int_to_ptr.vmem [resolvable:$true] %s19
      %22 = dma.hbm_to_vmem [thread:$0]  %s17, 128, %s20, [#allocation3]
    $region5: #{tpu_custom_call.1} parent=1 // pred_fallthru
      _
    // Predicated region
    $region6: #{tpu_custom_call.1} parent=1 // pred_check
      _
    $region7: #{tpu_custom_call.1} parent=1 // pred_check_branch
      %24 = sbr.rel (0) target = $region9
    $region8: #{tpu_custom_call.1} parent=1 // pred_region
      %s25 = sadd.s32 0, 0
      %s27 = ssub.s32 128, 128
      %28 = vsyncadd [#allocation6], %s27
      %s29 = smul.addr %s25, 128
      %s30 = scalar_lea.hbm %s1, %s29
      %s32 = sshll.u32 [#allocation5], 4
      %s33 = int_to_ptr.vmem [resolvable:$true] %s32
      %35 = dma.hbm_to_vmem [thread:$0]  %s30, 128, %s33, [#allocation6]
    $region9: #{tpu_custom_call.1} parent=1 // pred_fallthru
      _
    // Predicated region
    $region10: #{tpu_custom_call.1} parent=1 // pred_check
      _
    $region11: #{tpu_custom_call.1} parent=1 // pred_check_branch
      %37 = sbr.rel (0) target = $region13
    $region12: #{tpu_custom_call.1} parent=1 // pred_region
      %38 = dma.done [#allocation3], 128
    $region13: #{tpu_custom_call.1} parent=1 // pred_fallthru
      _
    // Predicated region
    $region14: #{tpu_custom_call.1} parent=1 // pred_check
      _
    $region15: #{tpu_custom_call.1} parent=1 // pred_check_branch
      %40 = sbr.rel (0) target = $region17
    $region16: #{tpu_custom_call.1} parent=1 // pred_region
      %41 = dma.done [#allocation6], 128
    $region17: #{tpu_custom_call.1} parent=1 // pred_fallthru
      _
    %s42 = sadd.s32 0, 0
    %s43 = sadd.s32 0, 0
    %s44 = sadd.s32 0, 0
    %p45 = scmp.eq.s32.totalorder 0, 0
    // Predicated region
    $region18: #{tpu_custom_call.1} parent=1 // pred_check
      %p46 = pneg %p45
    $region19: #{tpu_custom_call.1} parent=1 // pred_check_branch
      %48 = sbr.rel (%p46) target = $region21
    $region20: #{tpu_custom_call.1} parent=1 // pred_region
      %49 = vst [vmem:[#allocation7] sm:$0xff] 0.0
    $region21: #{tpu_custom_call.1} parent=1 // pred_fallthru
      _
    %v50 = vld [vmem:[#allocation2] sm:$0xff]
    %v51 = vld [vmem:[#allocation5] sm:$0xff]
    %v52 = vlaneseq
    %v53 = vand.u32 %v52, 127
    %v54 = vlaneseq
    %v55 = vshrl.u32 %v54, 7
    %s56 = smul.u32 %s44, 8
    %v57 = vstv %s56
    %v58 = vadd.s32 %v57, %v55
    %vm59 = vcmp.lt.s32.totalorder %v58, 8
    %vm60 = vcmp.lt.s32.totalorder %v53, 16
    %v61 = vsel %vm60, %v51, -inf
    %vm62 = vcmask 138240
    %v63 = vsel %vm62, %v61, -inf
    %64 = vmax.xlane.f32.xlu0 %v63
    %v65 = vpop.xlane.xlu0 %64
    %vm66 = vcmp.eq.f32.partialorder %v61, %v65
    %v67 = vsel %vm66, %v53, 16
    %v68 = vsel %vm62, %v67, 2147483647
    %v69 = vand.u32 %v68, 65535
    %v70 = vshra.s32 %v68, 16
    %v71 = vcvt.s32.f32 %v69
    %v72 = vcvt.s32.f32 %v70
    %73 = vmin.xlane.f32.xlu0 %v72
    %v74 = vpop.xlane.xlu0 %73
    %vm75 = vcmp.eq.f32.partialorder %v72, %v74
    %v76 = vsel %vm75, %v71, inf
    %77 = vmin.xlane.f32.xlu0 %v76
    %v78 = vpop.xlane.xlu0 %77
    %v79 = vcvt.f32.s32 %v78
    %v80 = vcvt.f32.s32 %v74
    %v81 = vshll.u32 %v80, 16
    %v82 = vadd.s32 %v81, %v79
    %vm83 = vcmp.eq.s32.totalorder %v53, %v82
    %v84 = vsel %vm83, %v50, 0.0
    %v85 = vsel %vm62, %v84, 0.0
    %86 = vadd.xlane.f32.xlu0 %v85
    %v87 = vpop.xlane.xlu0 %86
    %v88 = vsel %vm60, %v50, -inf
    %v89 = vsel %vm62, %v88, -inf
    %90 = vmax.xlane.f32.xlu0 %v89
    %v91 = vpop.xlane.xlu0 %90
    %v92 = vsub.f32 %v88, %v91
    %v93 = vmul.f32 %v92, 1.442695
    %v94 = vpow.pop %v93
    %v95 = vsel %vm62, %v94, 0.0
    %96 = vadd.xlane.f32.xlu0 %v95
    %v97 = vpop.xlane.xlu0 %96
    %v98 = vlog2.pop %v97
    %v99 = vmul.f32 %v98, 0.6931472
    %v100 = vadd.f32 %v99, %v91
    %v101 = vsub.f32 %v100, %v87
    %v102 = vsel %vm59, %v101, 0.0
    %vm103 = vcmask 7168
    %v104 = vsel %vm103, %v102, 0.0
    %105 = vadd.xlane.f32.xlu0 %v104
    %v106 = vpop.xlane.xlu0 %105
    %v107 = vrot.slane %v106, 4
    %v108 = vadd.f32 %v106, %v107
    %v109 = vrot.slane %v108, 2
    %v110 = vadd.f32 %v108, %v109
    %v111 = vrot.slane %v110, 1
    %v112 = vadd.f32 %v110, %v111
    %s113 = vtos %v112
    %v114 = vsub.f32 %v50, %v51
    %vm115 = vcmp.eq.s32.totalorder %v53, 16
    %v116 = vsel %vm59, 1, 0
    %vm117 = vcmp.eq.s32.totalorder %v116, 1
    %vm118 = vmand %vm117, %vm115
    %v119 = vmul.f32 %v114, %v114
    %v120 = vsel %vm118, %v119, 0.0
    %v121 = vsel %vm62, %v120, 0.0
    %122 = vadd.xlane.f32.xlu0 %v121
    %v123 = vpop.xlane.xlu0 %122
    %v124 = vrot.slane %v123, 4
    %v125 = vadd.f32 %v123, %v124
    %v126 = vrot.slane %v125, 2
    %v127 = vadd.f32 %v125, %v126
    %v128 = vrot.slane %v127, 1
    %v129 = vadd.f32 %v127, %v128
    %s130 = vtos %v129
    %vm131 = vcmp.eq.s32.totalorder %v55, 0
    %vm132 = vcmp.eq.s32.totalorder %v53, 0
    %vm133 = vmand %vm131, %vm132
    %v134 = vstv %s113
    %v135 = vsel %vm133, %v134, 0.0
    %vm136 = vcmp.eq.s32.totalorder %v53, 1
    %vm137 = vmand %vm131, %vm136
    %v138 = vstv %s130
    %v139 = vsel %vm137, %v138, 0.0
    %v140 = vadd.f32 %v135, %v139
    %v141 = vld [vmem:[#allocation7] sm:$0xff]
    %v142 = vadd.f32 %v141, %v140
    %143 = vst [vmem:[#allocation7] sm:$0xff] %v142
    // Predicated region
    $region22: #{tpu_custom_call.1} parent=1 // pred_check
      _
    $region23: #{tpu_custom_call.1} parent=1 // pred_check_branch
      %145 = sbr.rel (0) target = $region25
    $region24: #{tpu_custom_call.1} parent=1 // pred_region
      %s147 = ssub.s32 128, 128
      %148 = vsyncadd [#allocation4], %s147
      %s150 = sshll.u32 [#allocation7], 4
      %s151 = int_to_ptr.vmem [resolvable:$true] %s150
      %153 = dma.vmem_to_hbm [thread:$0]  %s151, 128, %s2, [#allocation4]
    $region25: #{tpu_custom_call.1} parent=1 // pred_fallthru
      _
    // Predicated region
    $region26: #{tpu_custom_call.1} parent=1 // pred_check
      _
    $region27: #{tpu_custom_call.1} parent=1 // pred_check_branch
      %155 = sbr.rel (0) target = $region29
    $region28: #{tpu_custom_call.1} parent=1 // pred_region
      %156 = dma.done [#allocation4], 128
    $region29: #{tpu_custom_call.1} parent=1 // pred_fallthru
      _
    %157 = vsyncpa [#allocation3], 1
    %158 = vsyncpa [#allocation6], 1
    %159 = vsyncpa [#allocation4], 1

</llo_original>
